<compile_context>
chip_gen: v7x
topology: tpu7x:2x2x1
jax: 0.10.0
libtpu: 0.0.40
codegen_flags: <defaults>
</compile_context>

<pallas_src>
import jax
import jax.numpy as jnp
from jax.experimental import pallas as pl
from jax.experimental.pallas import tpu as pltpu

D_MODEL = 128
# TODO(synk): `d_ff` is a module-level global in the reference file but is not defined
# in the provided snippet; we use the conventional d_ff = 2 * d_model = 256.
D_FF = 2 * D_MODEL

BN_EPS = 1e-5   # nn.BatchNorm1d default
LN_EPS = 1e-5   # nn.LayerNorm default


# ---------------------------------------------------------------------------
# in-kernel helpers
# ---------------------------------------------------------------------------
def _gelu(x):
    # tanh approximation of nn.GELU (exact form uses erf); deviation ~1e-3.
    # Runs in the dtype of x (bf16 between the matmuls on v6e/v7x).
    c = 0.7978845608028654  # sqrt(2/pi)
    return 0.5 * x * (1.0 + jnp.tanh(c * (x + 0.044715 * x * x * x)))


def _layer_norm(x, eps=LN_EPS):
    # nn.LayerNorm(d_model) is constructed fresh inside forward() -> gamma=1, beta=0.
    # Single pass: var = E[x^2] - mu^2 (one reduce chain, one VPU pass).
    mu = jnp.mean(x, axis=-1, keepdims=True)
    ms = jnp.mean(x * x, axis=-1, keepdims=True)
    var = ms - mu * mu
    return (x - mu) * jax.lax.rsqrt(var + eps)


# ---------------------------------------------------------------------------
# fused FFN kernel: one row-tile of the flattened (B*L, d_model) activation
# ---------------------------------------------------------------------------
def _ffn_kernel(x_ref, w1_ref, w2_ref, b2_ref, o_ref):
    x = x_ref[...]                                        # (TM, D) f32; residual stays f32

    # fc: Linear(d_model, d_ff, bias=False) + GELU
    # bf16 MXU operands, f32 accumulate; GELU runs in bf16 (feeds the next MXU op
    # as bf16 anyway, so no extra precision loss vs. casting after GELU).
    h = jnp.dot(x.astype(jnp.bfloat16), w1_ref[...],
                preferred_element_type=jnp.float32)       # (TM, D_FF) f32
    h = _gelu(h.astype(jnp.bfloat16))                     # (TM, D_FF) bf16

    # BatchNorm1d(d_ff) (inference, running stats) is folded into w2'/bias in the
    # wrapper, and Dropout(0.2) is the identity at inference:
    #   y = (h*scale + shift) @ w2 = h @ (scale[:,None]*w2) + shift @ w2
    # TODO(synk): training-mode BN (batch statistics) / Dropout masking not implemented.
    y = jnp.dot(h, w2_ref[...],
                preferred_element_type=jnp.float32) + b2_ref[...]   # (TM, D) f32

    # residual + LayerNorm(d_model)
    o_ref[...] = _layer_norm(y + x)


def _pick_tm(M):
    """Row tile: multiple of 8, divides M, <= 1024, and >= 2 grid steps when possible
    so both v7x TensorCores get work via the 'parallel' axis."""
    if M <= 8 or (M % 8) != 0:
        return M                        # full-array block (always a legal BlockSpec)
    target = min(1024, max(8, M // 2))  # M//2 guarantees >= 2 grid steps
    tm = 8
    c = 8
    while c <= target:
        if M % c == 0:
            tm = c
        c += 8
    return tm


def poswise_feed_forward(x, params):
    """x: [batch, seq, d_model] -> [batch, seq, d_model] (inference forward)."""
    B, L, D = x.shape
    assert D == D_MODEL
    M = B * L
    x2 = x.reshape(M, D)     # flatten: MXU sees M = B*L rows

    # Fold inference BN into fc2 (done in the wrapper, f32, then bf16 for the MXU).
    gamma, beta, mean, var = (params["bn_gamma"], params["bn_beta"],
                              params["bn_mean"], params["bn_var"])
    scale = gamma * jax.lax.rsqrt(var + BN_EPS)            # (D_FF,)
    shift = beta - mean * scale                            # (D_FF,)
    w1_b = params["w1"].astype(jnp.bfloat16)               # (D, D_FF)
    w2_f = params["w2"]                                    # (D_FF, D) f32
    w2_b = (scale[:, None] * w2_f).astype(jnp.bfloat16)    # (D_FF, D) bf16
    b2 = (shift @ w2_f).reshape(1, D_MODEL).astype(jnp.float32)  # (1, D)

    tm = _pick_tm(M)
    grid = (M // tm,)

    out = pl.pallas_call(
        _ffn_kernel,
        grid=grid,
        in_specs=[
            pl.BlockSpec((tm, D), lambda i: (i, 0)),          # activation row tile
            pl.BlockSpec((D, D_FF), lambda i: (0, 0)),        # w1  (bf16, grid-invariant)
            pl.BlockSpec((D_FF, D), lambda i: (0, 0)),        # w2' (bf16, BN folded)
            pl.BlockSpec((1, D), lambda i: (0, 0)),           # folded BN bias (f32)
        ],
        out_specs=pl.BlockSpec((tm, D), lambda i: (i, 0)),    # lane-dense (last dim 128)
        out_shape=jax.ShapeDtypeStruct((M, D), jnp.float32),
        compiler_params=pltpu.CompilerParams(
            dimension_semantics=("parallel",)),
    )(x2, w1_b, w2_b, b2)
    return out.reshape(B, L, D)


# ---------------------------------------------------------------------------
# parameters (deterministic, in-script; synthetic — no checkpoint load)
# ---------------------------------------------------------------------------
def init_params(key):
    k1, k2 = jax.random.split(key)
    w = lambda k, shape: (0.02 * jax.random.normal(k, shape)).astype(jnp.float32)
    return dict(
        w1=w(k1, (D_MODEL, D_FF)),
        w2=w(k2, (D_FF, D_MODEL)),
        # BatchNorm1d(d_ff) defaults: gamma=1, beta=0, running_mean=0, running_var=1
        bn_gamma=jnp.ones((D_FF,), jnp.float32),
        bn_beta=jnp.zeros((D_FF,), jnp.float32),
        bn_mean=jnp.zeros((D_FF,), jnp.float32),
        bn_var=jnp.ones((D_FF,), jnp.float32),
    )


if __name__ == "__main__":
    key = jax.random.PRNGKey(0)
    kx, kp = jax.random.split(key)
    B, SEQ = 2, 8
    x = jax.random.normal(kx, (B, SEQ, D_MODEL), dtype=jnp.float32)
    params = init_params(kp)

    fwd = jax.jit(poswise_feed_forward)
    out = fwd(x, params)
    jax.block_until_ready(out)

    assert out.shape == (B, SEQ, D_MODEL)
    assert bool(jnp.all(jnp.isfinite(out)))
    print("KERNEL_OK")
</pallas_src>

<mosaic_0001>
module attributes {stable_mosaic.version = 11 : i64} {
  func.func @_ffn_kernel(%arg0: i32, %arg1: memref<8x128xf32, #tpu.memory_space<vmem>>, %arg2: memref<128x256xbf16, #tpu.memory_space<vmem>>, %arg3: memref<256x128xbf16, #tpu.memory_space<vmem>>, %arg4: memref<1x128xf32, #tpu.memory_space<vmem>>, %arg5: memref<8x128xf32, #tpu.memory_space<vmem>>) attributes {dimension_semantics = [#tpu.dimension_semantics<parallel>], iteration_bounds = array<i64: 2>, scalar_prefetch = 0 : i64, scratch_operands = 0 : i64, tpu.core_type = #tpu.core_type<tc>, window_params = [{transform_indices = @transform_0, window_bounds = array<i64: 8, 128>}, {pipeline_mode = #tpu.pipeline_mode<synchronous>, transform_indices = @transform_1, window_bounds = array<i64: 128, 256>}, {pipeline_mode = #tpu.pipeline_mode<synchronous>, transform_indices = @transform_2, window_bounds = array<i64: 256, 128>}, {pipeline_mode = #tpu.pipeline_mode<synchronous>, transform_indices = @transform_3, window_bounds = array<i64: 1, 128>}, {transform_indices = @transform_4, window_bounds = array<i64: 8, 128>}]} {
    %c0 = arith.constant 0 : index
    %c0_0 = arith.constant 0 : index
    %0 = vector.load %arg1[%c0, %c0_0] : memref<8x128xf32, #tpu.memory_space<vmem>>, vector<8x128xf32>
    %1 = arith.truncf %0 : vector<8x128xf32> to vector<8x128xbf16>
    %c0_1 = arith.constant 0 : index
    %c0_2 = arith.constant 0 : index
    %2 = vector.load %arg2[%c0_1, %c0_2] : memref<128x256xbf16, #tpu.memory_space<vmem>>, vector<128x256xbf16>
    %cst = arith.constant dense<0.000000e+00> : vector<8x256xf32>
    %3 = tpu.matmul %1, %2, %cst {dimension_numbers = #tpu.dot_dimension_numbers<[1], [0], [0], [1], [0, 0, 1, 1], [], []>} : vector<8x128xbf16>, vector<128x256xbf16>, vector<8x256xf32> -> vector<8x256xf32>
    %4 = arith.truncf %3 : vector<8x256xf32> to vector<8x256xbf16>
    %cst_3 = arith.constant 5.000000e-01 : bf16
    %5 = vector.broadcast %cst_3 : bf16 to vector<8x256xbf16>
    %6 = arith.mulf %5, %4 : vector<8x256xbf16>
    %cst_4 = arith.constant 4.467770e-02 : bf16
    %7 = vector.broadcast %cst_4 : bf16 to vector<8x256xbf16>
    %8 = arith.mulf %7, %4 : vector<8x256xbf16>
    %9 = arith.mulf %8, %4 : vector<8x256xbf16>
    %10 = arith.mulf %9, %4 : vector<8x256xbf16>
    %11 = arith.addf %4, %10 : vector<8x256xbf16>
    %cst_5 = arith.constant 7.968750e-01 : bf16
    %12 = vector.broadcast %cst_5 : bf16 to vector<8x256xbf16>
    %13 = arith.mulf %12, %11 : vector<8x256xbf16>
    %14 = math.tanh %13 : vector<8x256xbf16>
    %cst_6 = arith.constant 1.000000e+00 : bf16
    %15 = vector.broadcast %cst_6 : bf16 to vector<8x256xbf16>
    %16 = arith.addf %15, %14 : vector<8x256xbf16>
    %17 = arith.mulf %6, %16 : vector<8x256xbf16>
    %c0_7 = arith.constant 0 : index
    %c0_8 = arith.constant 0 : index
    %18 = vector.load %arg3[%c0_7, %c0_8] : memref<256x128xbf16, #tpu.memory_space<vmem>>, vector<256x128xbf16>
    %cst_9 = arith.constant dense<0.000000e+00> : vector<8x128xf32>
    %19 = tpu.matmul %17, %18, %cst_9 {dimension_numbers = #tpu.dot_dimension_numbers<[1], [0], [0], [1], [0, 0, 1, 1], [], []>} : vector<8x256xbf16>, vector<256x128xbf16>, vector<8x128xf32> -> vector<8x128xf32>
    %c0_10 = arith.constant 0 : index
    %c0_11 = arith.constant 0 : index
    %20 = vector.load %arg4[%c0_10, %c0_11] : memref<1x128xf32, #tpu.memory_space<vmem>>, vector<1x128xf32>
    %21 = vector.broadcast %20 : vector<1x128xf32> to vector<8x128xf32>
    %22 = arith.addf %19, %21 : vector<8x128xf32>
    %23 = arith.addf %22, %0 : vector<8x128xf32>
    %cst_12 = arith.constant dense<0.000000e+00> : vector<8xf32>
    %24 = vector.multi_reduction <add>, %23, %cst_12 [1] : vector<8x128xf32> to vector<8xf32>
    %25 = vector.shape_cast %24 : vector<8xf32> to vector<8x1xf32>
    %cst_13 = arith.constant 1.280000e+02 : f32
    %26 = vector.broadcast %cst_13 : f32 to vector<8x1xf32>
    %27 = arith.divf %25, %26 : vector<8x1xf32>
    %28 = arith.mulf %23, %23 : vector<8x128xf32>
    %cst_14 = arith.constant dense<0.000000e+00> : vector<8xf32>
    %29 = vector.multi_reduction <add>, %28, %cst_14 [1] : vector<8x128xf32> to vector<8xf32>
    %30 = vector.shape_cast %29 : vector<8xf32> to vector<8x1xf32>
    %cst_15 = arith.constant 1.280000e+02 : f32
    %31 = vector.broadcast %cst_15 : f32 to vector<8x1xf32>
    %32 = arith.divf %30, %31 : vector<8x1xf32>
    %33 = arith.mulf %27, %27 : vector<8x1xf32>
    %34 = arith.subf %32, %33 : vector<8x1xf32>
    %35 = vector.broadcast %27 : vector<8x1xf32> to vector<8x128xf32>
    %36 = arith.subf %23, %35 : vector<8x128xf32>
    %cst_16 = arith.constant 9.99999974E-6 : f32
    %37 = vector.broadcast %cst_16 : f32 to vector<8x1xf32>
    %38 = arith.addf %34, %37 : vector<8x1xf32>
    %39 = math.rsqrt %38 : vector<8x1xf32>
    %40 = vector.broadcast %39 : vector<8x1xf32> to vector<8x128xf32>
    %41 = arith.mulf %36, %40 : vector<8x128xf32>
    %c0_17 = arith.constant 0 : index
    %c0_18 = arith.constant 0 : index
    %42 = vector.load %arg5[%c0_17, %c0_18] : memref<8x128xf32, #tpu.memory_space<vmem>>, vector<8x128xf32>
    tpu.vector_store %arg5[%c0_17, %c0_18], %41 {strides = array<i32>} : memref<8x128xf32, #tpu.memory_space<vmem>>, vector<8x128xf32>,
    return
  }
  func.func @transform_0(%arg0: i32) -> (i32, i32) {
    %c0_i32 = arith.constant 0 : i32
    %c0_i32_0 = arith.constant 0 : i32
    return %arg0, %c0_i32 : i32, i32
  }
  func.func @transform_1(%arg0: i32) -> (i32, i32) {
    %c0_i32 = arith.constant 0 : i32
    %c0_i32_0 = arith.constant 0 : i32
    %c0_i32_1 = arith.constant 0 : i32
    return %c0_i32, %c0_i32_0 : i32, i32
  }
  func.func @transform_2(%arg0: i32) -> (i32, i32) {
    %c0_i32 = arith.constant 0 : i32
    %c0_i32_0 = arith.constant 0 : i32
    %c0_i32_1 = arith.constant 0 : i32
    return %c0_i32, %c0_i32_0 : i32, i32
  }
  func.func @transform_3(%arg0: i32) -> (i32, i32) {
    %c0_i32 = arith.constant 0 : i32
    %c0_i32_0 = arith.constant 0 : i32
    %c0_i32_1 = arith.constant 0 : i32
    return %c0_i32, %c0_i32_0 : i32, i32
  }
  func.func @transform_4(%arg0: i32) -> (i32, i32) {
    %c0_i32 = arith.constant 0 : i32
    %c0_i32_0 = arith.constant 0 : i32
    return %arg0, %c0_i32 : i32, i32
  }
}

</mosaic_0001>

<llo_original>
// kernel: poswise_feed_forward.1
$region0: #{poswise_feed_forward.1}
  #allocation0 [shape = 'u32[]', space=smem, size = 0x4, offset = 0x4, fixed_abs, tag = 'smem constant byte address 0x4 - core index']
  #allocation1 [shape = 'u32[144,128]{1,0:T(1,128)}', space=vmem, size = 0x12000, scoped, tag = 'internal scratch']
  %s0 = inlined_call_operand.vmem [shape: f32[16,128], index: 0, kind: input, shape index: {}]
  %s1 = inlined_call_operand.vmem [shape: bf16[128,256], index: 1, kind: input, shape index: {}]
  %s2 = inlined_call_operand.vmem [shape: bf16[256,128], index: 2, kind: input, shape index: {}]
  %s3 = inlined_call_operand.vmem [shape: f32[1,128], index: 3, kind: input, shape index: {}]
  %s4 = inlined_call_operand.hbm [shape: f32[16,128], index: 4, kind: output, shape index: {}]
  %s5 = sld [smem:[#allocation0]]
  $region49: #{poswise_feed_forward.1} parent=0
    _
  %s7 = ssub.s32 1, %s5
  %s8 = scalar_select 0, %s7, %s5
  $region1: #{poswise_feed_forward.1} parent=0
    #allocation2 [shape = 'u8[8192]{0}', space=vmem, size = 0x2000, scoped, tag = 'output window, operand 0']
    #allocation3 [shape = 's32[2]{0}', space=sflag, size = 0x8, scoped, tag = 'scoped memory for poswise_feed_forward.1']
    %9 = vsyncpa [#allocation3], 0
    %s10 = scalar_lea.sflag [#allocation3], 1
    %11 = vsyncpa %s10, 0
    loop: start=0, step=1, limit=4
    $region2: #{poswise_feed_forward.1} parent=1 // loop_pre_header
      _
    $region3: #{poswise_feed_forward.1} parent=1 // loop_header
      %s13 = sphi 0, %s17
      %p14 = scmp.ge.s32.totalorder %s13, 4
      %s23 = sphi 0, %s25
      %s26 = sphi 0, %s23
      %s27 = sphi 0, %s26
      %s43 = sphi 0, %s27
      %s47 = sphi 0, %s47
      %s49 = sphi 0, %s47
      %s50 = sphi 0, %s49
      %s64 = sphi 0, %s50
      %s68 = sphi 0, %s68
      %s70 = sphi 0, %s68
      %s71 = sphi 0, %s70
      %s85 = sphi 0, %s71
      %s89 = sphi 0, %s89
      %s91 = sphi 0, %s89
      %s92 = sphi 0, %s91
      %s106 = sphi 0, %s92
      %s112 = sphi 0, %s114
      %s115 = sphi 0, %s112
      %s116 = sphi 0, %s115
      %s132 = sphi 0, %s116
    $region4: #{poswise_feed_forward.1} parent=1 // loop_header_branch
      %16 = sbr.rel (%p14) target = $region8
    $region5: #{poswise_feed_forward.1} parent=1 // loop_body
      %s18 = ssub.s32 %s13, 1
      %s19 = ssub.s32 %s13, 2
      %s20 = sadd.s32 %s13, 1
      %s21 = ssub.s32 %s13, %s20
      %p22 = scmp.eq.s32.totalorder %s21, 0
      %s24 = sadd.s32 %s23, 1
      %s25 = scalar_select %p22, %s23, %s24
      %p28 = pneg %p22
      %p29 = scmp.eq.s32.totalorder %s13, 1
      %p30 = por %p28, %p29
      %p31 = scmp.ne.s32.totalorder %s23, %s26
      %p32 = scmp.eq.s32.totalorder %s13, 0
      %p33 = por %p31, %p32
      %p34 = scmp.ne.s32.totalorder %s23, %s26
      %p35 = scmp.eq.s32.totalorder %s18, 1
      %p36 = por %p34, %p35
      %p37 = scmp.ne.s32.totalorder %s26, %s27
      %p38 = scmp.eq.s32.totalorder %s18, 0
      %p39 = por %p37, %p38
      %p40 = scmp.ne.s32.totalorder %s26, %s27
      %p41 = scmp.eq.s32.totalorder %s19, 1
      %p42 = por %p40, %p41
      %p44 = scmp.ne.s32.totalorder %s27, %s43
      %p45 = scmp.eq.s32.totalorder %s19, 0
      %p46 = por %p44, %p45
      %s48 = sadd.s32 %s47, 1
      %p51 = scmp.eq.s32.totalorder %s13, 1
      %p52 = scmp.ne.s32.totalorder %s47, %s49
      %p53 = scmp.eq.s32.totalorder %s13, 0
      %p54 = por %p52, %p53
      %p55 = scmp.ne.s32.totalorder %s47, %s49
      %p56 = scmp.eq.s32.totalorder %s18, 1
      %p57 = por %p55, %p56
      %p58 = scmp.ne.s32.totalorder %s49, %s50
      %p59 = scmp.eq.s32.totalorder %s18, 0
      %p60 = por %p58, %p59
      %p61 = scmp.ne.s32.totalorder %s49, %s50
      %p62 = scmp.eq.s32.totalorder %s19, 1
      %p63 = por %p61, %p62
      %p65 = scmp.ne.s32.totalorder %s50, %s64
      %p66 = scmp.eq.s32.totalorder %s19, 0
      %p67 = por %p65, %p66
      %s69 = sadd.s32 %s68, 1
      %p72 = scmp.eq.s32.totalorder %s13, 1
      %p73 = scmp.ne.s32.totalorder %s68, %s70
      %p74 = scmp.eq.s32.totalorder %s13, 0
      %p75 = por %p73, %p74
      %p76 = scmp.ne.s32.totalorder %s68, %s70
      %p77 = scmp.eq.s32.totalorder %s18, 1
      %p78 = por %p76, %p77
      %p79 = scmp.ne.s32.totalorder %s70, %s71
      %p80 = scmp.eq.s32.totalorder %s18, 0
      %p81 = por %p79, %p80
      %p82 = scmp.ne.s32.totalorder %s70, %s71
      %p83 = scmp.eq.s32.totalorder %s19, 1
      %p84 = por %p82, %p83
      %p86 = scmp.ne.s32.totalorder %s71, %s85
      %p87 = scmp.eq.s32.totalorder %s19, 0
      %p88 = por %p86, %p87
      %s90 = sadd.s32 %s89, 1
      %p93 = scmp.eq.s32.totalorder %s13, 1
      %p94 = scmp.ne.s32.totalorder %s89, %s91
      %p95 = scmp.eq.s32.totalorder %s13, 0
      %p96 = por %p94, %p95
      %p97 = scmp.ne.s32.totalorder %s89, %s91
      %p98 = scmp.eq.s32.totalorder %s18, 1
      %p99 = por %p97, %p98
      %p100 = scmp.ne.s32.totalorder %s91, %s92
      %p101 = scmp.eq.s32.totalorder %s18, 0
      %p102 = por %p100, %p101
      %p103 = scmp.ne.s32.totalorder %s91, %s92
      %p104 = scmp.eq.s32.totalorder %s19, 1
      %p105 = por %p103, %p104
      %p107 = scmp.ne.s32.totalorder %s92, %s106
      %p108 = scmp.eq.s32.totalorder %s19, 0
      %p109 = por %p107, %p108
      %s110 = ssub.s32 %s13, %s20
      %p111 = scmp.eq.s32.totalorder %s110, 0
      %s113 = sadd.s32 %s112, 1
      %s114 = scalar_select %p111, %s112, %s113
      %p117 = pneg %p111
      %p118 = scmp.eq.s32.totalorder %s13, 1
      %p119 = por %p117, %p118
      %p120 = scmp.ne.s32.totalorder %s112, %s115
      %p121 = scmp.eq.s32.totalorder %s13, 0
      %p122 = por %p120, %p121
      %p123 = scmp.ne.s32.totalorder %s112, %s115
      %p124 = scmp.eq.s32.totalorder %s18, 1
      %p125 = por %p123, %p124
      %p126 = scmp.ne.s32.totalorder %s115, %s116
      %p127 = scmp.eq.s32.totalorder %s18, 0
      %p128 = por %p126, %p127
      %p129 = scmp.ne.s32.totalorder %s115, %s116
      %p130 = scmp.eq.s32.totalorder %s19, 1
      %p131 = por %p129, %p130
      %p133 = scmp.ne.s32.totalorder %s116, %s132
      %p134 = scmp.eq.s32.totalorder %s19, 0
      %p135 = por %p133, %p134
      %p136 = scmp.le.s32.totalorder 1, %s13
      %p137 = scmp.lt.s32.totalorder %s13, 3
      %p138 = pnand %p136, %p137
      %p139 = pneg %p138
      // Predicated region
      $region9: #{poswise_feed_forward.1} parent=5 // pred_check
        _
      $region10: #{poswise_feed_forward.1} parent=5 // pred_check_branch
        %141 = sbr.rel (%p138) target = $region12
      $region11: #{poswise_feed_forward.1} parent=5 // pred_region
        %s142 = ssub.s32 %s13, 1
        // Predicated region
        $region13: #{poswise_feed_forward.1} parent=11 // pred_check
          %p143 = pneg %p60
        $region14: #{poswise_feed_forward.1} parent=11 // pred_check_branch
          %145 = sbr.rel (%p143) target = $region16
        $region15: #{poswise_feed_forward.1} parent=11 // pred_region
          _
        $region16: #{poswise_feed_forward.1} parent=11 // pred_fallthru
          _
        // Predicated region
        $region17: #{poswise_feed_forward.1} parent=11 // pred_check
          %p146 = pneg %p81
        $region18: #{poswise_feed_forward.1} parent=11 // pred_check_branch
          %148 = sbr.rel (%p146) target = $region20
        $region19: #{poswise_feed_forward.1} parent=11 // pred_region
          _
        $region20: #{poswise_feed_forward.1} parent=11 // pred_fallthru
          _
        // Predicated region
        $region21: #{poswise_feed_forward.1} parent=11 // pred_check
          %p149 = pneg %p102
        $region22: #{poswise_feed_forward.1} parent=11 // pred_check_branch
          %151 = sbr.rel (%p149) target = $region24
        $region23: #{poswise_feed_forward.1} parent=11 // pred_region
          _
        $region24: #{poswise_feed_forward.1} parent=11 // pred_fallthru
          _
      $region12: #{poswise_feed_forward.1} parent=5 // pred_fallthru
        _
      %p152 = scmp.lt.s32.totalorder %s13, 2
      // Predicated region
      $region25: #{poswise_feed_forward.1} parent=5 // pred_check
        %p153 = pneg %p152
      $region26: #{poswise_feed_forward.1} parent=5 // pred_check_branch
        %155 = sbr.rel (%p153) target = $region28
      $region27: #{poswise_feed_forward.1} parent=5 // pred_region
        // Predicated region
        $region29: #{poswise_feed_forward.1} parent=27 // pred_check
          %p156 = pneg %p33
        $region30: #{poswise_feed_forward.1} parent=27 // pred_check_branch
          %158 = sbr.rel (%p156) target = $region32
        $region31: #{poswise_feed_forward.1} parent=27 // pred_region
          %p159 = scmp.lt.s32.totalorder %s13, 1
          %s160 = scalar_select %p159, %s13, 1
          %s161 = smul.addr %s160, 8
          %s162 = scalar_lea.vmem %s0, %s161
        $region32: #{poswise_feed_forward.1} parent=27 // pred_fallthru
          _
      $region28: #{poswise_feed_forward.1} parent=5 // pred_fallthru
        _
      %p163 = scmp.le.s32.totalorder 1, %s13
      %p164 = scmp.lt.s32.totalorder %s13, 3
      %p165 = pnand %p163, %p164
      %p166 = pneg %p165
      // Predicated region
      $region33: #{poswise_feed_forward.1} parent=5 // pred_check
        _
      $region34: #{poswise_feed_forward.1} parent=5 // pred_check_branch
        %168 = sbr.rel (%p165) target = $region36
      $region35: #{poswise_feed_forward.1} parent=5 // pred_region
        %s169 = ssub.s32 %s13, 1
        %p170 = scmp.lt.s32.totalorder %s18, 1
        %s171 = scalar_select %p170, %s18, 1
        %s172 = smul.addr %s171, 8
        %s173 = scalar_lea.vmem %s0, %s172
        %p174 = pneg %p39
        %p175 = pneg %p36
        %p176 = pneg %p60
        %p177 = pneg %p57
        %p178 = pneg %p81
        %p179 = pneg %p78
        %p180 = pneg %p102
        %p181 = pneg %p99
        %p182 = pneg %p128
        %p183 = pneg %p125
        %s184 = sand.u32 %s115, 1
        %s185 = scalar_lea.sflag [#allocation3], %s184
        %s186 = sand.u32 %s115, 1
        %s187 = smul.addr %s186, 8
        %s188 = scalar_lea.vmem [#allocation2], %s187
        %p189 = scmp.lt.s32.totalorder %s18, 1
        %s190 = scalar_select %p189, %s18, 1
        %s191 = smul.addr %s190, 8
        %s192 = scalar_lea.vmem %s0, %s191
        %v198 = vld [vmem:[%s192] sm:$0xff]
        %v199 = vpack.c.bf16 %v198, %v198
        %v200 = vld [vmem:[%s1] sm:$0xff]
        %v201 = vld [vmem:[%s1 + $0x8] sm:$0xff]
        %v202 = vld [vmem:[%s1 + $0x10] sm:$0xff]
        %v203 = vld [vmem:[%s1 + $0x18] sm:$0xff]
        %v204 = vld [vmem:[%s1 + $0x20] sm:$0xff]
        %v205 = vld [vmem:[%s1 + $0x28] sm:$0xff]
        %v206 = vld [vmem:[%s1 + $0x30] sm:$0xff]
        %v207 = vld [vmem:[%s1 + $0x38] sm:$0xff]
        %v208 = vld [vmem:[%s1 + $0x40] sm:$0xff]
        %v209 = vld [vmem:[%s1 + $0x48] sm:$0xff]
        %v210 = vld [vmem:[%s1 + $0x50] sm:$0xff]
        %v211 = vld [vmem:[%s1 + $0x58] sm:$0xff]
        %v212 = vld [vmem:[%s1 + $0x60] sm:$0xff]
        %v213 = vld [vmem:[%s1 + $0x68] sm:$0xff]
        %v214 = vld [vmem:[%s1 + $0x70] sm:$0xff]
        %v215 = vld [vmem:[%s1 + $0x78] sm:$0xff]
        %v232 = vunpack.c.l.b16 %v200
        %v233 = vunpack.c.h.b16 %v200
        %v234 = vunpack.c.l.b16 %v201
        %v235 = vunpack.c.h.b16 %v201
        %v236 = vunpack.c.l.b16 %v202
        %v237 = vunpack.c.h.b16 %v202
        %v238 = vunpack.c.l.b16 %v203
        %v239 = vunpack.c.h.b16 %v203
        %v240 = vunpack.c.l.b16 %v204
        %v241 = vunpack.c.h.b16 %v204
        %v242 = vunpack.c.l.b16 %v205
        %v243 = vunpack.c.h.b16 %v205
        %v244 = vunpack.c.l.b16 %v206
        %v245 = vunpack.c.h.b16 %v206
        %v246 = vunpack.c.l.b16 %v207
        %v247 = vunpack.c.h.b16 %v207
        %v248 = vunpack.c.l.b16 %v208
        %v249 = vunpack.c.h.b16 %v208
        %v250 = vunpack.c.l.b16 %v209
        %v251 = vunpack.c.h.b16 %v209
        %v252 = vunpack.c.l.b16 %v210
        %v253 = vunpack.c.h.b16 %v210
        %v254 = vunpack.c.l.b16 %v211
        %v255 = vunpack.c.h.b16 %v211
        %v256 = vunpack.c.l.b16 %v212
        %v257 = vunpack.c.h.b16 %v212
        %v258 = vunpack.c.l.b16 %v213
        %v259 = vunpack.c.h.b16 %v213
        %v260 = vunpack.c.l.b16 %v214
        %v261 = vunpack.c.h.b16 %v214
        %v262 = vunpack.c.l.b16 %v215
        %v263 = vunpack.c.h.b16 %v215
        %v264 = vpack.c.b16 %v234, %v232
        %v265 = vpack.c.b16 %v235, %v233
        %v266 = vpack.c.b16 %v238, %v236
        %v267 = vpack.c.b16 %v239, %v237
        %v268 = vpack.c.b16 %v242, %v240
        %v269 = vpack.c.b16 %v243, %v241
        %v270 = vpack.c.b16 %v246, %v244
        %v271 = vpack.c.b16 %v247, %v245
        %v272 = vpack.c.b16 %v250, %v248
        %v273 = vpack.c.b16 %v251, %v249
        %v274 = vpack.c.b16 %v254, %v252
        %v275 = vpack.c.b16 %v255, %v253
        %v276 = vpack.c.b16 %v258, %v256
        %v277 = vpack.c.b16 %v259, %v257
        %v278 = vpack.c.b16 %v262, %v260
        %v279 = vpack.c.b16 %v263, %v261
        %296 = vmatprep.subr.bf16.mxu0 %v265
        %297 = vmatpush1.bf16.msra.mxu0 %v264
        %298 = vmatprep.subr.bf16.mxu0 %v267
        %299 = vmatpush1.bf16.msra.mxu0 %v266
        %300 = vmatprep.subr.bf16.mxu0 %v269
        %301 = vmatpush1.bf16.msra.mxu0 %v268
        %302 = vmatprep.subr.bf16.mxu0 %v271
        %303 = vmatpush1.bf16.msra.mxu0 %v270
        %304 = vmatprep.subr.bf16.mxu0 %v273
        %305 = vmatpush1.bf16.msra.mxu0 %v272
        %306 = vmatprep.subr.bf16.mxu0 %v275
        %307 = vmatpush1.bf16.msra.mxu0 %v274
        %308 = vmatprep.subr.bf16.mxu0 %v277
        %309 = vmatpush1.bf16.msra.mxu0 %v276
        %310 = vmatprep.subr.bf16.mxu0 %v279
        %311 = vmatpush1.bf16.msra.mxu0 %v278
        %312 = vmatprep.subr.bf16.mxu0 0
        %313 = vmatpush1.bf16.msra.mxu0 0
        %314 = vmatprep.subr.bf16.mxu0 0
        %315 = vmatpush1.bf16.msra.mxu0 0
        %316 = vmatprep.subr.bf16.mxu0 0
        %317 = vmatpush1.bf16.msra.mxu0 0
        %318 = vmatprep.subr.bf16.mxu0 0
        %319 = vmatpush1.bf16.msra.mxu0 0
        %320 = vmatprep.subr.bf16.mxu0 0
        %321 = vmatpush1.bf16.msra.mxu0 0
        %322 = vmatprep.subr.bf16.mxu0 0
        %323 = vmatpush1.bf16.msra.mxu0 0
        %324 = vmatprep.subr.bf16.mxu0 0
        %325 = vmatpush1.bf16.msra.mxu0 0
        %326 = vmatprep.subr.bf16.mxu0 0
        %327 = vmatpush1.bf16.msra.mxu0 0
        %328 = vmatprep.mubr.bf16.mxu0 0
        %329 = vmatmul.mubr.bf16.gmra.mrb[0].mxu0 %v199
        %v330 = vpop.f32.mrb[0].mxu0
        %v331 = vadd.f32 0.0, %v330
        %v332 = vpop.f32.mrb[0].mxu0
        %v333 = vadd.f32 0.0, %v332
        %v334 = vpop.f32.mrb[0].mxu0
        %v335 = vpop.f32.mrb[0].mxu0
        %336 = vdwg.mxu0
        %v337 = vpack.c.bf16 %v331, %v331
        %v338 = vpack.c.bf16 %v333, %v333
        %v339 = vmul.bf16 %v337, 1056980736
        %v340 = vmul.bf16 %v338, 1056980736
        %v341 = vmul.bf16 %v337, 1027030327
        %v342 = vmul.bf16 %v338, 1027030327
        %v343 = vmul.bf16 %v341, %v337
        %v344 = vmul.bf16 %v342, %v338
        %v345 = vmul.bf16 %v343, %v337
        %v346 = vmul.bf16 %v344, %v338
        %v347 = vadd.bf16 %v337, %v345
        %v348 = vadd.bf16 %v338, %v346
        %v349 = vmul.bf16 %v347, 1061961548
        %v350 = vmul.bf16 %v348, 1061961548
        %v351 = vtanh.bf16.pop %v349
        %v352 = vtanh.bf16.pop %v350
        %v353 = vadd.bf16 %v351, 1065369472
        %v354 = vadd.bf16 %v352, 1065369472
        %v355 = vmul.bf16 %v339, %v353
        %v356 = vmul.bf16 %v340, %v354
        %v357 = vld [vmem:[%s2] sm:$0xf]
        %v358 = vld [vmem:[%s2 + $0x4] sm:$0xf]
        %v359 = vld [vmem:[%s2 + $0x8] sm:$0xf]
        %v360 = vld [vmem:[%s2 + $0xc] sm:$0xf]
        %v361 = vld [vmem:[%s2 + $0x10] sm:$0xf]
        %v362 = vld [vmem:[%s2 + $0x14] sm:$0xf]
        %v363 = vld [vmem:[%s2 + $0x18] sm:$0xf]
        %v364 = vld [vmem:[%s2 + $0x1c] sm:$0xf]
        %v365 = vld [vmem:[%s2 + $0x20] sm:$0xf]
        %v366 = vld [vmem:[%s2 + $0x24] sm:$0xf]
        %v367 = vld [vmem:[%s2 + $0x28] sm:$0xf]
        %v368 = vld [vmem:[%s2 + $0x2c] sm:$0xf]
        %v369 = vld [vmem:[%s2 + $0x30] sm:$0xf]
        %v370 = vld [vmem:[%s2 + $0x34] sm:$0xf]
        %v371 = vld [vmem:[%s2 + $0x38] sm:$0xf]
        %v372 = vld [vmem:[%s2 + $0x3c] sm:$0xf]
        %v373 = vld [vmem:[%s2 + $0x40] sm:$0xf]
        %v374 = vld [vmem:[%s2 + $0x44] sm:$0xf]
        %v375 = vld [vmem:[%s2 + $0x48] sm:$0xf]
        %v376 = vld [vmem:[%s2 + $0x4c] sm:$0xf]
        %v377 = vld [vmem:[%s2 + $0x50] sm:$0xf]
        %v378 = vld [vmem:[%s2 + $0x54] sm:$0xf]
        %v379 = vld [vmem:[%s2 + $0x58] sm:$0xf]
        %v380 = vld [vmem:[%s2 + $0x5c] sm:$0xf]
        %v381 = vld [vmem:[%s2 + $0x60] sm:$0xf]
        %v382 = vld [vmem:[%s2 + $0x64] sm:$0xf]
        %v383 = vld [vmem:[%s2 + $0x68] sm:$0xf]
        %v384 = vld [vmem:[%s2 + $0x6c] sm:$0xf]
        %v385 = vld [vmem:[%s2 + $0x70] sm:$0xf]
        %v386 = vld [vmem:[%s2 + $0x74] sm:$0xf]
        %v387 = vld [vmem:[%s2 + $0x78] sm:$0xf]
        %v388 = vld [vmem:[%s2 + $0x7c] sm:$0xf]
        %v389 = vld [vmem:[%s3] sm:$0x1]
        %v391 = vlaneseq
        %v392 = vshrl.u32 %v391, 7
        %v393 = vsub.s32 0, %v392
        %v394 = vrot.slane %v389, %v393
        %v428 = vunpack.c.l.b16 %v357
        %v429 = vunpack.c.l.b16 %v358
        %v430 = vunpack.c.l.b16 %v359
        %v431 = vunpack.c.l.b16 %v360
        %v432 = vunpack.c.l.b16 %v361
        %v433 = vunpack.c.l.b16 %v362
        %v434 = vunpack.c.l.b16 %v363
        %v435 = vunpack.c.l.b16 %v364
        %v436 = vunpack.c.l.b16 %v365
        %v437 = vunpack.c.l.b16 %v366
        %v438 = vunpack.c.l.b16 %v367
        %v439 = vunpack.c.l.b16 %v368
        %v440 = vunpack.c.l.b16 %v369
        %v441 = vunpack.c.l.b16 %v370
        %v442 = vunpack.c.l.b16 %v371
        %v443 = vunpack.c.l.b16 %v372
        %v444 = vunpack.c.l.b16 %v373
        %v445 = vunpack.c.l.b16 %v374
        %v446 = vunpack.c.l.b16 %v375
        %v447 = vunpack.c.l.b16 %v376
        %v448 = vunpack.c.l.b16 %v377
        %v449 = vunpack.c.l.b16 %v378
        %v450 = vunpack.c.l.b16 %v379
        %v451 = vunpack.c.l.b16 %v380
        %v452 = vunpack.c.l.b16 %v381
        %v453 = vunpack.c.l.b16 %v382
        %v454 = vunpack.c.l.b16 %v383
        %v455 = vunpack.c.l.b16 %v384
        %v456 = vunpack.c.l.b16 %v385
        %v457 = vunpack.c.l.b16 %v386
        %v458 = vunpack.c.l.b16 %v387
        %v459 = vunpack.c.l.b16 %v388
        %v460 = vpack.c.b16 %v429, %v428
        %v461 = vpack.c.b16 %v431, %v430
        %v462 = vpack.c.b16 %v433, %v432
        %v463 = vpack.c.b16 %v435, %v434
        %v464 = vpack.c.b16 %v437, %v436
        %v465 = vpack.c.b16 %v439, %v438
        %v466 = vpack.c.b16 %v441, %v440
        %v467 = vpack.c.b16 %v443, %v442
        %v468 = vpack.c.b16 %v445, %v444
        %v469 = vpack.c.b16 %v447, %v446
        %v470 = vpack.c.b16 %v449, %v448
        %v471 = vpack.c.b16 %v451, %v450
        %v472 = vpack.c.b16 %v453, %v452
        %v473 = vpack.c.b16 %v455, %v454
        %v474 = vpack.c.b16 %v457, %v456
        %v475 = vpack.c.b16 %v459, %v458
        %492 = vmatprep.subr.bf16.mxu0 0
        %493 = vmatpush1.bf16.msra.mxu0 %v460
        %494 = vmatprep.subr.bf16.mxu0 0
        %495 = vmatpush1.bf16.msra.mxu0 %v461
        %496 = vmatprep.subr.bf16.mxu0 0
        %497 = vmatpush1.bf16.msra.mxu0 %v462
        %498 = vmatprep.subr.bf16.mxu0 0
        %499 = vmatpush1.bf16.msra.mxu0 %v463
        %500 = vmatprep.subr.bf16.mxu0 0
        %501 = vmatpush1.bf16.msra.mxu0 %v464
        %502 = vmatprep.subr.bf16.mxu0 0
        %503 = vmatpush1.bf16.msra.mxu0 %v465
        %504 = vmatprep.subr.bf16.mxu0 0
        %505 = vmatpush1.bf16.msra.mxu0 %v466
        %506 = vmatprep.subr.bf16.mxu0 0
        %507 = vmatpush1.bf16.msra.mxu0 %v467
        %508 = vmatprep.subr.bf16.mxu0 0
        %509 = vmatpush1.bf16.msra.mxu0 %v468
        %510 = vmatprep.subr.bf16.mxu0 0
        %511 = vmatpush1.bf16.msra.mxu0 %v469
        %512 = vmatprep.subr.bf16.mxu0 0
        %513 = vmatpush1.bf16.msra.mxu0 %v470
        %514 = vmatprep.subr.bf16.mxu0 0
        %515 = vmatpush1.bf16.msra.mxu0 %v471
        %516 = vmatprep.subr.bf16.mxu0 0
        %517 = vmatpush1.bf16.msra.mxu0 %v472
        %518 = vmatprep.subr.bf16.mxu0 0
        %519 = vmatpush1.bf16.msra.mxu0 %v473
        %520 = vmatprep.subr.bf16.mxu0 0
        %521 = vmatpush1.bf16.msra.mxu0 %v474
        %522 = vmatprep.subr.bf16.mxu0 0
        %523 = vmatpush1.bf16.msra.mxu0 %v475
        %524 = vmatprep.mubr.bf16.mxu0 %v356
        %525 = vmatmul.mubr.bf16.gmra.mrb[0].mxu0 %v355
        %v526 = vpop.f32.mrb[0].mxu0
        %v527 = vadd.f32 %v394, %v526
        %v528 = vpop.f32.mrb[0].mxu0
        %v529 = vpop.f32.mrb[0].mxu0
        %v530 = vpop.f32.mrb[0].mxu0
        %531 = vdwg.mxu0
        %v532 = vadd.f32 %v527, %v198
        %533 = vadd.xlane.f32.xlu0 %v532
        %v534 = vpop.xlane.xlu0 %533
        %v535 = vrcp.pop 128.0
        %v536 = vmul.f32 %v534, %v535
        %v537 = vmul.f32 %v532, %v532
        %538 = vadd.xlane.f32.xlu0 %v537
        %v539 = vpop.xlane.xlu0 %538
        %v540 = vmul.f32 %v539, %v535
        %v541 = vmul.f32 %v536, %v536
        %v542 = vsub.f32 %v540, %v541
        %v543 = vsub.f32 %v532, %v536
        %v544 = vadd.f32 %v542, 1e-05
        %v545 = vrsqrt.pop %v544
        %v546 = vmul.f32 %v543, %v545
        %547 = vst [vmem:[%s188] sm:$0xff] %v546
        %s548 = sand.u32 %s115, 1
        %s549 = scalar_lea.sflag [#allocation3], %s548
        %s550 = sand.u32 %s115, 1
        %s551 = smul.addr %s550, 8
        %s552 = scalar_lea.vmem [#allocation2], %s551
        // Predicated region
        $region37: #{poswise_feed_forward.1} parent=35 // pred_check
          %p553 = pneg %p125
        $region38: #{poswise_feed_forward.1} parent=35 // pred_check_branch
          %555 = sbr.rel (%p553) target = $region40
        $region39: #{poswise_feed_forward.1} parent=35 // pred_region
          %s557 = ssub.s32 128, 128
          %558 = vsyncadd %s549, %s557
          %s559 = smul.addr %s18, 128
          %s560 = scalar_lea.hbm %s4, %s559
          %s562 = sshll.u32 %s552, 4
          %s563 = int_to_ptr.vmem [resolvable:$true] %s562
          %565 = dma.vmem_to_hbm [thread:$0]  %s563, 128, %s560, %s549
        $region40: #{poswise_feed_forward.1} parent=35 // pred_fallthru
          _
      $region36: #{poswise_feed_forward.1} parent=5 // pred_fallthru
        _
      %p566 = scmp.le.s32.totalorder 2, %s13
      // Predicated region
      $region41: #{poswise_feed_forward.1} parent=5 // pred_check
        %p567 = pneg %p566
      $region42: #{poswise_feed_forward.1} parent=5 // pred_check_branch
        %569 = sbr.rel (%p567) target = $region44
      $region43: #{poswise_feed_forward.1} parent=5 // pred_region
        %s570 = ssub.s32 %s13, 2
        // Predicated region
        $region45: #{poswise_feed_forward.1} parent=43 // pred_check
          %p571 = pneg %p131
        $region46: #{poswise_feed_forward.1} parent=43 // pred_check_branch
          %573 = sbr.rel (%p571) target = $region48
        $region47: #{poswise_feed_forward.1} parent=43 // pred_region
          %s574 = sand.u32 %s116, 1
          %s575 = scalar_lea.sflag [#allocation3], %s574
          %s576 = sand.u32 %s116, 1
          %s577 = smul.addr %s576, 8
          %s578 = scalar_lea.vmem [#allocation2], %s577
          %579 = dma.done %s575, 128
        $region48: #{poswise_feed_forward.1} parent=43 // pred_fallthru
          _
      $region44: #{poswise_feed_forward.1} parent=5 // pred_fallthru
        _
    $region6: #{poswise_feed_forward.1} parent=1 // loop_footer
      %s17 = sadd.s32 1, %s13
    $region7: #{poswise_feed_forward.1} parent=1 // loop_footer_branch
      %12 = sbr.rel target = $region3
    $region8: #{poswise_feed_forward.1} parent=1 // loop_exit
      _
    %580 = vsyncpa [#allocation3], 1
    %s581 = scalar_lea.sflag [#allocation3], 1
    %582 = vsyncpa %s581, 1

</llo_original>
